<compile_context>
chip_gen: v7x
topology: tpu7x:2x2x1
jax: 0.10.0
libtpu: 0.0.40
codegen_flags: <defaults>
</compile_context>

<pallas_src>
import jax
import jax.numpy as jnp
from jax import lax
from jax.experimental import pallas as pl
from jax.experimental.pallas import tpu as pltpu


VMEM_LIMIT_BYTES = 32 * 1024 * 1024  # within v7x's 64 MiB physical VMEM, raises v5e default


def _round_up(x, m):
    return (x + m - 1) // m * m


def _pick_tile(n_pad_hint):
    if n_pad_hint <= 128:
        return 128
    if n_pad_hint <= 4096:
        return 256
    return 512


# ---------------------------------------------------------------------------
# Kernel 1: feature transform  XW = X @ W   (row-tiled, bf16 output)
# ---------------------------------------------------------------------------
def xw_kernel(x_ref, w_ref, o_ref):
    o_ref[...] = jnp.dot(
        x_ref[...], w_ref[...], preferred_element_type=jnp.float32
    ).astype(o_ref.dtype)


# ---------------------------------------------------------------------------
# Kernel 2: weighted aggregation  out = diag(inv_deg) @ A @ XW + b
#   grid = (dst-row tiles, src-col tiles), k (src) is the reduction axis.
#   meta_ref (SMEM, scalar-prefetched) = [tile_mask | remap_i | remap_k], each length T.
# ---------------------------------------------------------------------------
def make_agg_kernel(num_k, T):
    def agg_kernel(meta_ref, a_ref, xw_ref, inv_ref, b_ref, o_ref, acc_ref):
        i = pl.program_id(0)
        k = pl.program_id(1)
        nk = pl.num_programs(1)
        flat = i * num_k + k

        @pl.when(k == 0)
        def _init():
            acc_ref[...] = jnp.zeros_like(acc_ref)

        # Skip MXU work for all-zero adjacency tiles (their buffers hold a stale,
        # deduped tile and must not be used).
        @pl.when(meta_ref[flat] != 0)
        def _accumulate():
            acc_ref[...] += jnp.dot(
                a_ref[...], xw_ref[...], preferred_element_type=jnp.float32
            )

        @pl.when(k == nk - 1)
        def _epilogue():
            # EdgeWeightNorm('right'): scale each dst row by 1/in_degree, then add bias.
            o_ref[...] = acc_ref[...] * inv_ref[...] + b_ref[...]

    return agg_kernel


# ---------------------------------------------------------------------------
# Wrapper
# ---------------------------------------------------------------------------
def weighted_graph_conv(adj, indeg, x, w, b, *, tile=None):
    """adj:(N,N) weighted dense adjacency (dst-major), indeg:(N,1) float in-degree,
    x:(N,Fin), w:(Fin,Fout), b:(1,Fout) -> (N,Fout) float32."""
    N = adj.shape[0]
    Fin = x.shape[1]
    Fout = w.shape[1]

    if tile is None:
        tile = _pick_tile(_round_up(N, 128))
    n_pad = _round_up(N, tile)
    fin_pad = _round_up(Fin, 128)
    fout_pad = _round_up(Fout, 128)

    # --- pad to hardware-friendly shapes (zeros do not change the math) ---
    adj_f32 = jnp.pad(adj.astype(jnp.float32), ((0, n_pad - N), (0, n_pad - N)))
    x_p = jnp.pad(x.astype(jnp.float32), ((0, n_pad - N), (0, fin_pad - Fin)))
    w_p = jnp.pad(w.astype(jnp.float32), ((0, fin_pad - Fin), (0, fout_pad - Fout)))
    b_p = jnp.pad(b.astype(jnp.float32), ((0, 0), (0, fout_pad - Fout)))

    # Reciprocal in-degree once (zero in-degree rows are all-zero in A, so the scale
    # value there is irrelevant; clamp avoids inf).
    inv_deg = 1.0 / jnp.maximum(indeg.astype(jnp.float32), 1.0)
    inv_p = jnp.pad(inv_deg, ((0, n_pad - N), (0, 0)))

    # Streamed operand goes to bf16 (f32 accumulation in-kernel).
    adj_bf16 = adj_f32.astype(jnp.bfloat16)

    num_i = n_pad // tile
    num_k = n_pad // tile
    T = num_i * num_k

    # --- block-sparsity metadata (scalar-prefetched into SMEM) --------------
    # tile_mask[i,k] = tile (i,k) of A has any nonzero.
    tile_mask = jnp.any(
        adj_f32.reshape(num_i, tile, num_k, tile) != 0.0, axis=(1, 3)
    ).reshape(-1)
    flat_mask = tile_mask.astype(jnp.int32)
    # remap[t] = flat index of the last nonzero tile at or before t (0 before any).
    # Masked grid steps return the same block index as the previous step, so the
    # auto-pipeliner skips their A / XW DMAs entirely.
    marked = jnp.where(flat_mask > 0, jnp.arange(T, dtype=jnp.int32), jnp.int32(-1))
    last = jnp.maximum(lax.cummax(marked, axis=0), 0)
    remap_i = (last // num_k).astype(jnp.int32)
    remap_k = (last % num_k).astype(jnp.int32)
    meta = jnp.concatenate([flat_mask, remap_i, remap_k])  # (3*T,) int32 -> SMEM

    # --- Kernel 1: XW = X @ W (row-tiled) ---
    xw = pl.pallas_call(
        xw_kernel,
        out_shape=jax.ShapeDtypeStruct((n_pad, fout_pad), jnp.bfloat16),
        grid=(num_i,),
        in_specs=[
            pl.BlockSpec((tile, fin_pad), lambda i: (i, 0)),
            pl.BlockSpec((fin_pad, fout_pad), lambda i: (0, 0)),
        ],
        out_specs=pl.BlockSpec((tile, fout_pad), lambda i: (i, 0)),
        compiler_params=pltpu.CompilerParams(
            dimension_semantics=("parallel",),
            vmem_limit_bytes=VMEM_LIMIT_BYTES,
        ),
    )(x_p, w_p)

    # --- Kernel 2: tiled aggregation with f32 accumulator -------------------
    def a_index_map(i, k, meta_ref):
        f = i * num_k + k
        return (meta_ref[T + f], meta_ref[2 * T + f])

    def xw_index_map(i, k, meta_ref):
        f = i * num_k + k
        return (meta_ref[2 * T + f], 0)

    grid_spec = pltpu.PrefetchScalarGridSpec(
        num_scalar_prefetch=1,
        grid=(num_i, num_k),
        in_specs=[
            pl.BlockSpec((tile, tile), a_index_map),                  # A tile (bf16)
            pl.BlockSpec((tile, fout_pad), xw_index_map),             # XW tile (bf16)
            pl.BlockSpec((tile, 1), lambda i, k, m: (i, 0)),          # 1/in_degree (f32)
            pl.BlockSpec((1, fout_pad), lambda i, k, m: (0, 0)),      # bias (f32)
        ],
        out_specs=pl.BlockSpec((tile, fout_pad), lambda i, k, m: (i, 0)),
        scratch_shapes=[pltpu.VMEM((tile, fout_pad), jnp.float32)],
    )
    out_pad = pl.pallas_call(
        make_agg_kernel(num_k, T),
        out_shape=jax.ShapeDtypeStruct((n_pad, fout_pad), jnp.float32),
        grid_spec=grid_spec,
        compiler_params=pltpu.CompilerParams(
            dimension_semantics=("parallel", "arbitrary"),
            vmem_limit_bytes=VMEM_LIMIT_BYTES,
        ),
    )(meta, adj_bf16, xw, inv_p, b_p)

    return out_pad[:N, :Fout]


def build_dense_graph(src, dst, edge_weight, num_nodes):
    """Plain-JAX glue: densify the edge list into adjacency + (unweighted) in-degree."""
    # TODO(synk): the DGL graph object / edge-list scatter has no Pallas equivalent; the
    # densification stays in plain-JAX glue outside the kernels.
    adj = jnp.zeros((num_nodes, num_nodes), jnp.float32)
    adj = adj.at[dst, src].add(edge_weight)                        # A[v, u] += w_e
    indeg = jnp.zeros((num_nodes,), jnp.float32).at[dst].add(1.0)  # unweighted in-degree
    return adj, indeg.reshape(num_nodes, 1)


if __name__ == "__main__":
    key = jax.random.PRNGKey(0)
    k_src, k_dst, k_ew, k_x, k_w = jax.random.split(key, 5)

    # Small synthetic graph: N nodes, E directed edges.
    N, E = 16, 40
    in_feats, out_feats = 8, 32

    src = jax.random.randint(k_src, (E,), 0, N)
    dst = jax.random.randint(k_dst, (E,), 0, N)
    edge_weight = jax.random.uniform(k_ew, (E,), jnp.float32, 0.5, 1.5)  # self.edge_weight

    x = jax.random.normal(k_x, (N, in_feats), jnp.float32)

    # GraphConv params (glorot-uniform-ish weight, zero bias).
    limit = (6.0 / (in_feats + out_feats)) ** 0.5
    w = jax.random.uniform(k_w, (in_feats, out_feats), jnp.float32, -limit, limit)
    b = jnp.zeros((1, out_feats), jnp.float32)

    adj, indeg = build_dense_graph(src, dst, edge_weight, N)

    out = weighted_graph_conv(adj, indeg, x, w, b)
    out = jax.block_until_ready(out)

    # Pure-JAX f32 reference of the same math. Tolerance loosened because the kernel
    # streams A and XW in bf16 (accumulation stays f32).
    safe = jnp.maximum(indeg, 1.0)
    ref = (adj / safe) @ (x @ w) + b
    assert out.shape == ref.shape
    assert jnp.allclose(out, ref, atol=5e-2, rtol=5e-2), "mismatch vs reference"

    print("KERNEL_OK")
</pallas_src>

<mosaic_0001>
module attributes {stable_mosaic.version = 11 : i64} {
  func.func @xw_kernel(%arg0: i32, %arg1: memref<128x128xf32, #tpu.memory_space<vmem>>, %arg2: memref<128x128xf32, #tpu.memory_space<vmem>>, %arg3: memref<128x128xbf16, #tpu.memory_space<vmem>>) attributes {dimension_semantics = [#tpu.dimension_semantics<parallel>], iteration_bounds = array<i64: 1>, scalar_prefetch = 0 : i64, scratch_operands = 0 : i64, tpu.core_type = #tpu.core_type<tc>, window_params = [{transform_indices = @transform_0, window_bounds = array<i64: 128, 128>}, {pipeline_mode = #tpu.pipeline_mode<synchronous>, transform_indices = @transform_1, window_bounds = array<i64: 128, 128>}, {transform_indices = @transform_2, window_bounds = array<i64: 128, 128>}]} {
    %c0 = arith.constant 0 : index
    %c0_0 = arith.constant 0 : index
    %0 = vector.load %arg1[%c0, %c0_0] : memref<128x128xf32, #tpu.memory_space<vmem>>, vector<128x128xf32>
    %c0_1 = arith.constant 0 : index
    %c0_2 = arith.constant 0 : index
    %1 = vector.load %arg2[%c0_1, %c0_2] : memref<128x128xf32, #tpu.memory_space<vmem>>, vector<128x128xf32>
    %cst = arith.constant dense<0.000000e+00> : vector<128x128xf32>
    %2 = tpu.matmul %0, %1, %cst {dimension_numbers = #tpu.dot_dimension_numbers<[1], [0], [0], [1], [0, 0, 1, 1], [], []>} : vector<128x128xf32>, vector<128x128xf32>, vector<128x128xf32> -> vector<128x128xf32>
    %3 = arith.truncf %2 : vector<128x128xf32> to vector<128x128xbf16>
    %c0_3 = arith.constant 0 : index
    %c0_4 = arith.constant 0 : index
    %4 = vector.load %arg3[%c0_3, %c0_4] : memref<128x128xbf16, #tpu.memory_space<vmem>>, vector<128x128xbf16>
    tpu.vector_store %arg3[%c0_3, %c0_4], %3 {strides = array<i32>} : memref<128x128xbf16, #tpu.memory_space<vmem>>, vector<128x128xbf16>,
    return
  }
  func.func @transform_0(%arg0: i32) -> (i32, i32) {
    %c0_i32 = arith.constant 0 : i32
    %c0_i32_0 = arith.constant 0 : i32
    return %arg0, %c0_i32 : i32, i32
  }
  func.func @transform_1(%arg0: i32) -> (i32, i32) {
    %c0_i32 = arith.constant 0 : i32
    %c0_i32_0 = arith.constant 0 : i32
    %c0_i32_1 = arith.constant 0 : i32
    return %c0_i32, %c0_i32_0 : i32, i32
  }
  func.func @transform_2(%arg0: i32) -> (i32, i32) {
    %c0_i32 = arith.constant 0 : i32
    %c0_i32_0 = arith.constant 0 : i32
    return %arg0, %c0_i32 : i32, i32
  }
}

</mosaic_0001>

<llo_original>
// kernel: tpu_custom_call.1
$region0: #{tpu_custom_call.1}
  #allocation0 [shape = 'u32[]', space=smem, size = 0x4, offset = 0x4, fixed_abs, tag = 'smem constant byte address 0x4 - core index']
  #allocation1 [shape = 'u32[144,128]{1,0:T(1,128)}', space=vmem, size = 0x12000, scoped, tag = 'internal scratch']
  %s0 = inlined_call_operand.hbm [shape: f32[128,128], index: 0, kind: input, shape index: {}]
  %s1 = inlined_call_operand.hbm [shape: f32[128,128], index: 1, kind: input, shape index: {}]
  %s2 = inlined_call_operand.hbm [shape: bf16[128,128], index: 2, kind: output, shape index: {}]
  %s3 = sld [smem:[#allocation0]]
  $region26: #{tpu_custom_call.1} parent=0
    _
  %s5 = ssub.s32 1, %s3
  %s6 = scalar_select 0, %s5, %s3
  $region1: #{tpu_custom_call.1} parent=0
    #allocation2 [shape = 'u8[65536]{0}', space=vmem, size = 0x10000, scoped, tag = 'input window, operand 0, single buffered']
    #allocation3 [shape = 's32[1]{0}', space=sflag, size = 0x4, scoped, tag = 'scoped memory for tpu_custom_call.1']
    #allocation4 [shape = 's32[1]{0}', space=sflag, size = 0x4, scoped, tag = 'scoped memory for tpu_custom_call.1']
    #allocation5 [shape = 'u8[65536]{0}', space=vmem, size = 0x10000, scoped, tag = 'input window, operand 1, single buffered']
    #allocation6 [shape = 's32[1]{0}', space=sflag, size = 0x4, scoped, tag = 'scoped memory for tpu_custom_call.1']
    #allocation7 [shape = 'u8[32768]{0}', space=vmem, size = 0x8000, scoped, tag = 'output window, operand 0, single buffered']
    %7 = vsyncpa [#allocation3], 0
    %8 = vsyncpa [#allocation6], 0
    %9 = vsyncpa [#allocation4], 0
    // Predicated region
    $region2: #{tpu_custom_call.1} parent=1 // pred_check
      _
    $region3: #{tpu_custom_call.1} parent=1 // pred_check_branch
      %11 = sbr.rel (0) target = $region5
    $region4: #{tpu_custom_call.1} parent=1 // pred_region
      %s13 = ssub.s32 2048, 2048
      %14 = vsyncadd [#allocation3], %s13
      %s15 = sshll.u32 [#allocation2], 4
      %s16 = int_to_ptr.vmem [resolvable:$true] %s15
      %21 = dma.hbm_to_vmem [thread:$0]  %s0, 2048, %s16, [#allocation3], 128, 128, 8
    $region5: #{tpu_custom_call.1} parent=1 // pred_fallthru
      _
    // Predicated region
    $region6: #{tpu_custom_call.1} parent=1 // pred_check
      _
    $region7: #{tpu_custom_call.1} parent=1 // pred_check_branch
      %23 = sbr.rel (0) target = $region9
    $region8: #{tpu_custom_call.1} parent=1 // pred_region
      %s25 = ssub.s32 2048, 2048
      %26 = vsyncadd [#allocation6], %s25
      %s27 = sshll.u32 [#allocation5], 4
      %s28 = int_to_ptr.vmem [resolvable:$true] %s27
      %33 = dma.hbm_to_vmem [thread:$0]  %s1, 2048, %s28, [#allocation6], 128, 128, 8
    $region9: #{tpu_custom_call.1} parent=1 // pred_fallthru
      _
    // Predicated region
    $region10: #{tpu_custom_call.1} parent=1 // pred_check
      _
    $region11: #{tpu_custom_call.1} parent=1 // pred_check_branch
      %35 = sbr.rel (0) target = $region13
    $region12: #{tpu_custom_call.1} parent=1 // pred_region
      %36 = dma.done [#allocation3], 2048
    $region13: #{tpu_custom_call.1} parent=1 // pred_fallthru
      _
    // Predicated region
    $region14: #{tpu_custom_call.1} parent=1 // pred_check
      _
    $region15: #{tpu_custom_call.1} parent=1 // pred_check_branch
      %38 = sbr.rel (0) target = $region17
    $region16: #{tpu_custom_call.1} parent=1 // pred_region
      %39 = dma.done [#allocation6], 2048
    $region17: #{tpu_custom_call.1} parent=1 // pred_fallthru
      _
    %v40 = vld [vmem:[#allocation2] sm:$0xff]
    %v41 = vld [vmem:[#allocation2 + $0x8] sm:$0xff]
    %v42 = vld [vmem:[#allocation2 + $0x10] sm:$0xff]
    %v43 = vld [vmem:[#allocation2 + $0x18] sm:$0xff]
    %v44 = vld [vmem:[#allocation2 + $0x20] sm:$0xff]
    %v45 = vld [vmem:[#allocation2 + $0x28] sm:$0xff]
    %v46 = vld [vmem:[#allocation2 + $0x30] sm:$0xff]
    %v47 = vld [vmem:[#allocation2 + $0x38] sm:$0xff]
    %v48 = vld [vmem:[#allocation2 + $0x40] sm:$0xff]
    %v49 = vld [vmem:[#allocation2 + $0x48] sm:$0xff]
    %v50 = vld [vmem:[#allocation2 + $0x50] sm:$0xff]
    %v51 = vld [vmem:[#allocation2 + $0x58] sm:$0xff]
    %v52 = vld [vmem:[#allocation2 + $0x60] sm:$0xff]
    %v53 = vld [vmem:[#allocation2 + $0x68] sm:$0xff]
    %v54 = vld [vmem:[#allocation2 + $0x70] sm:$0xff]
    %v55 = vld [vmem:[#allocation2 + $0x78] sm:$0xff]
    %v56 = vld [vmem:[#allocation5] sm:$0xff]
    %v57 = vld [vmem:[#allocation5 + $0x8] sm:$0xff]
    %v58 = vld [vmem:[#allocation5 + $0x10] sm:$0xff]
    %v59 = vld [vmem:[#allocation5 + $0x18] sm:$0xff]
    %v60 = vld [vmem:[#allocation5 + $0x20] sm:$0xff]
    %v61 = vld [vmem:[#allocation5 + $0x28] sm:$0xff]
    %v62 = vld [vmem:[#allocation5 + $0x30] sm:$0xff]
    %v63 = vld [vmem:[#allocation5 + $0x38] sm:$0xff]
    %v64 = vld [vmem:[#allocation5 + $0x40] sm:$0xff]
    %v65 = vld [vmem:[#allocation5 + $0x48] sm:$0xff]
    %v66 = vld [vmem:[#allocation5 + $0x50] sm:$0xff]
    %v67 = vld [vmem:[#allocation5 + $0x58] sm:$0xff]
    %v68 = vld [vmem:[#allocation5 + $0x60] sm:$0xff]
    %v69 = vld [vmem:[#allocation5 + $0x68] sm:$0xff]
    %v70 = vld [vmem:[#allocation5 + $0x70] sm:$0xff]
    %v71 = vld [vmem:[#allocation5 + $0x78] sm:$0xff]
    %72 = vmatprep.subr.mxu0 0.0
    %73 = vmatpush1.msra.mxu0 %v56
    %74 = vmatprep.subr.mxu0 0.0
    %75 = vmatpush1.msra.mxu0 %v57
    %76 = vmatprep.subr.mxu0 0.0
    %77 = vmatpush1.msra.mxu0 %v58
    %78 = vmatprep.subr.mxu0 0.0
    %79 = vmatpush1.msra.mxu0 %v59
    %80 = vmatprep.subr.mxu0 0.0
    %81 = vmatpush1.msra.mxu0 %v60
    %82 = vmatprep.subr.mxu0 0.0
    %83 = vmatpush1.msra.mxu0 %v61
    %84 = vmatprep.subr.mxu0 0.0
    %85 = vmatpush1.msra.mxu0 %v62
    %86 = vmatprep.subr.mxu0 0.0
    %87 = vmatpush1.msra.mxu0 %v63
    %88 = vmatprep.subr.mxu0 0.0
    %89 = vmatpush1.msra.mxu0 %v64
    %90 = vmatprep.subr.mxu0 0.0
    %91 = vmatpush1.msra.mxu0 %v65
    %92 = vmatprep.subr.mxu0 0.0
    %93 = vmatpush1.msra.mxu0 %v66
    %94 = vmatprep.subr.mxu0 0.0
    %95 = vmatpush1.msra.mxu0 %v67
    %96 = vmatprep.subr.mxu0 0.0
    %97 = vmatpush1.msra.mxu0 %v68
    %98 = vmatprep.subr.mxu0 0.0
    %99 = vmatpush1.msra.mxu0 %v69
    %100 = vmatprep.subr.mxu0 0.0
    %101 = vmatpush1.msra.mxu0 %v70
    %102 = vmatprep.subr.mxu0 0.0
    %103 = vmatpush1.msra.mxu0 %v71
    %104 = vmatprep.subr.mxu0 0.0
    %105 = vmatpush1.msra.mxu0 0.0
    %106 = vmatprep.subr.mxu0 0.0
    %107 = vmatpush1.msra.mxu0 0.0
    %108 = vmatprep.subr.mxu0 0.0
    %109 = vmatpush1.msra.mxu0 0.0
    %110 = vmatprep.subr.mxu0 0.0
    %111 = vmatpush1.msra.mxu0 0.0
    %112 = vmatprep.subr.mxu0 0.0
    %113 = vmatpush1.msra.mxu0 0.0
    %114 = vmatprep.subr.mxu0 0.0
    %115 = vmatpush1.msra.mxu0 0.0
    %116 = vmatprep.subr.mxu0 0.0
    %117 = vmatpush1.msra.mxu0 0.0
    %118 = vmatprep.subr.mxu0 0.0
    %119 = vmatpush1.msra.mxu0 0.0
    %120 = vmatprep.subr.mxu0 0.0
    %121 = vmatpush1.msra.mxu0 0.0
    %122 = vmatprep.subr.mxu0 0.0
    %123 = vmatpush1.msra.mxu0 0.0
    %124 = vmatprep.subr.mxu0 0.0
    %125 = vmatpush1.msra.mxu0 0.0
    %126 = vmatprep.subr.mxu0 0.0
    %127 = vmatpush1.msra.mxu0 0.0
    %128 = vmatprep.subr.mxu0 0.0
    %129 = vmatpush1.msra.mxu0 0.0
    %130 = vmatprep.subr.mxu0 0.0
    %131 = vmatpush1.msra.mxu0 0.0
    %132 = vmatprep.subr.mxu0 0.0
    %133 = vmatpush1.msra.mxu0 0.0
    %134 = vmatprep.subr.mxu0 0.0
    %135 = vmatpush1.msra.mxu0 0.0
    %136 = vmatprep.mubr.f32.mxu0 0.0
    %137 = vmatmul.mubr.f32.gmra.mrb[0].mxu0 %v40
    %v138 = vpop.f32.mrb[0].mxu0
    %v139 = vadd.f32 0.0, %v138
    %v140 = vpop.f32.mrb[0].mxu0
    %141 = vmatprep.mubr.f32.mxu0 0.0
    %142 = vmatmul.mubr.f32.gmra.mrb[0].mxu0 %v41
    %v143 = vpop.f32.mrb[0].mxu0
    %v144 = vadd.f32 0.0, %v143
    %v145 = vpop.f32.mrb[0].mxu0
    %146 = vmatprep.mubr.f32.mxu0 0.0
    %147 = vmatmul.mubr.f32.gmra.mrb[0].mxu0 %v42
    %v148 = vpop.f32.mrb[0].mxu0
    %v149 = vadd.f32 0.0, %v148
    %v150 = vpop.f32.mrb[0].mxu0
    %151 = vmatprep.mubr.f32.mxu0 0.0
    %152 = vmatmul.mubr.f32.gmra.mrb[0].mxu0 %v43
    %v153 = vpop.f32.mrb[0].mxu0
    %v154 = vadd.f32 0.0, %v153
    %v155 = vpop.f32.mrb[0].mxu0
    %156 = vmatprep.mubr.f32.mxu0 0.0
    %157 = vmatmul.mubr.f32.gmra.mrb[0].mxu0 %v44
    %v158 = vpop.f32.mrb[0].mxu0
    %v159 = vadd.f32 0.0, %v158
    %v160 = vpop.f32.mrb[0].mxu0
    %161 = vmatprep.mubr.f32.mxu0 0.0
    %162 = vmatmul.mubr.f32.gmra.mrb[0].mxu0 %v45
    %v163 = vpop.f32.mrb[0].mxu0
    %v164 = vadd.f32 0.0, %v163
    %v165 = vpop.f32.mrb[0].mxu0
    %166 = vmatprep.mubr.f32.mxu0 0.0
    %167 = vmatmul.mubr.f32.gmra.mrb[0].mxu0 %v46
    %v168 = vpop.f32.mrb[0].mxu0
    %v169 = vadd.f32 0.0, %v168
    %v170 = vpop.f32.mrb[0].mxu0
    %171 = vmatprep.mubr.f32.mxu0 0.0
    %172 = vmatmul.mubr.f32.gmra.mrb[0].mxu0 %v47
    %v173 = vpop.f32.mrb[0].mxu0
    %v174 = vadd.f32 0.0, %v173
    %v175 = vpop.f32.mrb[0].mxu0
    %176 = vmatprep.mubr.f32.mxu0 0.0
    %177 = vmatmul.mubr.f32.gmra.mrb[0].mxu0 %v48
    %v178 = vpop.f32.mrb[0].mxu0
    %v179 = vadd.f32 0.0, %v178
    %v180 = vpop.f32.mrb[0].mxu0
    %181 = vmatprep.mubr.f32.mxu0 0.0
    %182 = vmatmul.mubr.f32.gmra.mrb[0].mxu0 %v49
    %v183 = vpop.f32.mrb[0].mxu0
    %v184 = vadd.f32 0.0, %v183
    %v185 = vpop.f32.mrb[0].mxu0
    %186 = vmatprep.mubr.f32.mxu0 0.0
    %187 = vmatmul.mubr.f32.gmra.mrb[0].mxu0 %v50
    %v188 = vpop.f32.mrb[0].mxu0
    %v189 = vadd.f32 0.0, %v188
    %v190 = vpop.f32.mrb[0].mxu0
    %191 = vmatprep.mubr.f32.mxu0 0.0
    %192 = vmatmul.mubr.f32.gmra.mrb[0].mxu0 %v51
    %v193 = vpop.f32.mrb[0].mxu0
    %v194 = vadd.f32 0.0, %v193
    %v195 = vpop.f32.mrb[0].mxu0
    %196 = vmatprep.mubr.f32.mxu0 0.0
    %197 = vmatmul.mubr.f32.gmra.mrb[0].mxu0 %v52
    %v198 = vpop.f32.mrb[0].mxu0
    %v199 = vadd.f32 0.0, %v198
    %v200 = vpop.f32.mrb[0].mxu0
    %201 = vmatprep.mubr.f32.mxu0 0.0
    %202 = vmatmul.mubr.f32.gmra.mrb[0].mxu0 %v53
    %v203 = vpop.f32.mrb[0].mxu0
    %v204 = vadd.f32 0.0, %v203
    %v205 = vpop.f32.mrb[0].mxu0
    %206 = vmatprep.mubr.f32.mxu0 0.0
    %207 = vmatmul.mubr.f32.gmra.mrb[0].mxu0 %v54
    %v208 = vpop.f32.mrb[0].mxu0
    %v209 = vadd.f32 0.0, %v208
    %v210 = vpop.f32.mrb[0].mxu0
    %211 = vmatprep.mubr.f32.mxu0 0.0
    %212 = vmatmul.mubr.f32.gmra.mrb[0].mxu0 %v55
    %v213 = vpop.f32.mrb[0].mxu0
    %v214 = vadd.f32 0.0, %v213
    %v215 = vpop.f32.mrb[0].mxu0
    %216 = vdwg.mxu0
    %v217 = vpack.c.bf16 %v144, %v139
    %v218 = vpack.c.bf16 %v154, %v149
    %v219 = vpack.c.bf16 %v164, %v159
    %v220 = vpack.c.bf16 %v174, %v169
    %v221 = vpack.c.bf16 %v184, %v179
    %v222 = vpack.c.bf16 %v194, %v189
    %v223 = vpack.c.bf16 %v204, %v199
    %v224 = vpack.c.bf16 %v214, %v209
    %v233 = vunpack.c.l.b16 %v217
    %v234 = vunpack.c.h.b16 %v217
    %v235 = vunpack.c.l.b16 %v218
    %v236 = vunpack.c.h.b16 %v218
    %v237 = vunpack.c.l.b16 %v219
    %v238 = vunpack.c.h.b16 %v219
    %v239 = vunpack.c.l.b16 %v220
    %v240 = vunpack.c.h.b16 %v220
    %v241 = vunpack.c.l.b16 %v221
    %v242 = vunpack.c.h.b16 %v221
    %v243 = vunpack.c.l.b16 %v222
    %v244 = vunpack.c.h.b16 %v222
    %v245 = vunpack.c.l.b16 %v223
    %v246 = vunpack.c.h.b16 %v223
    %v247 = vunpack.c.l.b16 %v224
    %v248 = vunpack.c.h.b16 %v224
    %v249 = vpack.c.b16 %v233, %v233
    %v250 = vpack.c.b16 %v234, %v234
    %v251 = vpack.c.b16 %v235, %v235
    %v252 = vpack.c.b16 %v236, %v236
    %v253 = vpack.c.b16 %v237, %v237
    %v254 = vpack.c.b16 %v238, %v238
    %v255 = vpack.c.b16 %v239, %v239
    %v256 = vpack.c.b16 %v240, %v240
    %v257 = vpack.c.b16 %v241, %v241
    %v258 = vpack.c.b16 %v242, %v242
    %v259 = vpack.c.b16 %v243, %v243
    %v260 = vpack.c.b16 %v244, %v244
    %v261 = vpack.c.b16 %v245, %v245
    %v262 = vpack.c.b16 %v246, %v246
    %v263 = vpack.c.b16 %v247, %v247
    %v264 = vpack.c.b16 %v248, %v248
    %281 = vst [vmem:[#allocation7] sm:$0xf] %v249
    %282 = vst [vmem:[#allocation7 + $0x4] sm:$0xf] %v250
    %283 = vst [vmem:[#allocation7 + $0x8] sm:$0xf] %v251
    %284 = vst [vmem:[#allocation7 + $0xc] sm:$0xf] %v252
    %285 = vst [vmem:[#allocation7 + $0x10] sm:$0xf] %v253
    %286 = vst [vmem:[#allocation7 + $0x14] sm:$0xf] %v254
    %287 = vst [vmem:[#allocation7 + $0x18] sm:$0xf] %v255
    %288 = vst [vmem:[#allocation7 + $0x1c] sm:$0xf] %v256
    %289 = vst [vmem:[#allocation7 + $0x20] sm:$0xf] %v257
    %290 = vst [vmem:[#allocation7 + $0x24] sm:$0xf] %v258
    %291 = vst [vmem:[#allocation7 + $0x28] sm:$0xf] %v259
    %292 = vst [vmem:[#allocation7 + $0x2c] sm:$0xf] %v260
    %293 = vst [vmem:[#allocation7 + $0x30] sm:$0xf] %v261
    %294 = vst [vmem:[#allocation7 + $0x34] sm:$0xf] %v262
    %295 = vst [vmem:[#allocation7 + $0x38] sm:$0xf] %v263
    %296 = vst [vmem:[#allocation7 + $0x3c] sm:$0xf] %v264
    // Predicated region
    $region18: #{tpu_custom_call.1} parent=1 // pred_check
      _
    $region19: #{tpu_custom_call.1} parent=1 // pred_check_branch
      %298 = sbr.rel (0) target = $region21
    $region20: #{tpu_custom_call.1} parent=1 // pred_region
      %s300 = ssub.s32 1024, 1024
      %301 = vsyncadd [#allocation4], %s300
      %s302 = sshll.u32 [#allocation7], 4
      %s303 = int_to_ptr.vmem [resolvable:$true] %s302
      %308 = dma.vmem_to_hbm [thread:$0]  %s303, 1024, %s2, [#allocation4], 64, 64, 4
    $region21: #{tpu_custom_call.1} parent=1 // pred_fallthru
      _
    // Predicated region
    $region22: #{tpu_custom_call.1} parent=1 // pred_check
      _
    $region23: #{tpu_custom_call.1} parent=1 // pred_check_branch
      %310 = sbr.rel (0) target = $region25
    $region24: #{tpu_custom_call.1} parent=1 // pred_region
      %311 = dma.done [#allocation4], 1024
    $region25: #{tpu_custom_call.1} parent=1 // pred_fallthru
      _
    %312 = vsyncpa [#allocation3], 1
    %313 = vsyncpa [#allocation6], 1
    %314 = vsyncpa [#allocation4], 1

</llo_original>
